<compile_context>
chip_gen: v6e
topology: v6e:2x2x1
jax: 0.10.0
libtpu: 0.0.40
codegen_flags: <defaults>
</compile_context>

<pallas_src>
import functools

import jax
import jax.numpy as jnp
from jax.experimental import pallas as pl
from jax.experimental.pallas import tpu as pltpu

# ----- deterministic "quant config" (what PPQ's TensorQuantizationConfig holds) -----
QUANT_MIN = -128.0
QUANT_MAX = 127.0
SCALE = 0.05      # per-tensor scale
OFFSET = 0.0      # symmetric quantization -> zero point 0

LANE = 128                      # lane width: multiple of 128 -> unmasked vst; most shapes divide it
TILE_BYTES = 2 * 1024 * 1024    # ~2 MiB per block (constant across dtypes)


def _make_fake_quant_kernel(scale: float, offset: float):
    """Elementwise fake-quant kernel; scale/offset are compile-time constants."""
    symmetric = (offset == 0.0)

    def kernel(x_ref, o_ref):
        x = x_ref[...].astype(jnp.float32)
        if symmetric:
            q = jnp.clip(jnp.round(x / scale), QUANT_MIN, QUANT_MAX)
            y = q * scale
        else:
            q = jnp.clip(jnp.round(x / scale + offset), QUANT_MIN, QUANT_MAX)
            y = (q - offset) * scale
        o_ref[...] = y.astype(o_ref.dtype)

    return kernel


# ---------- dimension-semantics resolution (CORE_PARALLEL if supported) ----------
_RESOLVED_SEMANTICS = None


def _probe_kernel(x_ref, o_ref):
    o_ref[...] = x_ref[...]


def _resolve_dimension_semantics():
    """Prefer CORE_PARALLEL (splits the grid across both TensorCores on v7x).

    Resolved once via a tiny odd-grid probe so a chip/runtime that rejects it
    falls back gracefully to "parallel"/"arbitrary".
    """
    global _RESOLVED_SEMANTICS
    if _RESOLVED_SEMANTICS is not None:
        return _RESOLVED_SEMANTICS

    candidates = []
    if hasattr(pltpu, "CORE_PARALLEL"):
        candidates.append(pltpu.CORE_PARALLEL)
    candidates.append("parallel")

    probe = jnp.zeros((24, LANE), jnp.float32)   # odd grid (3 tiles) to exercise uneven core split
    for sem in candidates:
        try:
            out = pl.pallas_call(
                _probe_kernel,
                out_shape=jax.ShapeDtypeStruct(probe.shape, probe.dtype),
                grid=(3,),
                in_specs=[pl.BlockSpec((8, LANE), lambda i: (i, 0))],
                out_specs=pl.BlockSpec((8, LANE), lambda i: (i, 0)),
                compiler_params=pltpu.CompilerParams(dimension_semantics=(sem,)),
            )(probe)
            jax.block_until_ready(out)
            _RESOLVED_SEMANTICS = sem
            return sem
        except Exception:
            continue

    _RESOLVED_SEMANTICS = "arbitrary"
    return _RESOLVED_SEMANTICS


# ------------------------------- main implementation -------------------------------
@functools.partial(jax.jit, static_argnames=("scale", "offset"))
def _tensor_quant_impl(x, *, scale: float, offset: float):
    orig_shape = x.shape
    total = x.size
    if total == 0:
        return x

    itemsize = jnp.dtype(x.dtype).itemsize
    rows = pl.cdiv(total, LANE)
    pad = rows * LANE - total

    flat = x.reshape(-1)
    if pad:
        # Only the sub-LANE tail (< 128 elems) is padded; divisible shapes take
        # the zero-copy path.  (allow_input_fusion could fuse this pad into the
        # pallas_call operand, but it takes per-input bools and the ragged path
        # is rare, so we keep the explicit tail-only pad.)
        flat = jnp.pad(flat, (0, pad))
    x2d = flat.reshape(rows, LANE)

    # Keep ~TILE_BYTES per block regardless of dtype; block rows are a multiple
    # of 8 unless a single block covers the whole (possibly short) array.
    target_rows = max(8, TILE_BYTES // (LANE * itemsize))
    if rows <= target_rows:
        tile_r = rows                       # single block == full array (any row count OK)
    else:
        tile_r = (target_rows // 8) * 8     # (8,128)-aligned; Pallas masks the ragged last block

    out2d = pl.pallas_call(
        _make_fake_quant_kernel(scale, offset),
        out_shape=jax.ShapeDtypeStruct((rows, LANE), x.dtype),
        grid=(pl.cdiv(rows, tile_r),),
        in_specs=[pl.BlockSpec((tile_r, LANE), lambda i: (i, 0))],
        out_specs=pl.BlockSpec((tile_r, LANE), lambda i: (i, 0)),
        compiler_params=pltpu.CompilerParams(
            dimension_semantics=(_RESOLVED_SEMANTICS,),
        ),
        cost_estimate=pl.CostEstimate(
            flops=6 * total,
            transcendentals=0,
            bytes_accessed=2 * total * itemsize,
        ),
    )(x2d)

    if pad:
        return out2d.reshape(-1)[:total].reshape(orig_shape)
    return out2d.reshape(orig_shape)


def tensor_quant(x: jax.Array, scale: float = SCALE, offset: float = OFFSET) -> jax.Array:
    """Pallas implementation of TensorQuant.forward (QuantFunction, per-tensor linear)."""
    global _RESOLVED_SEMANTICS
    _resolve_dimension_semantics()
    try:
        return _tensor_quant_impl(x, scale=float(scale), offset=float(offset))
    except Exception:
        if _RESOLVED_SEMANTICS == "arbitrary":
            raise
        # Safety net: if the preferred semantics fails for this shape, drop to
        # the always-safe setting and retry once.
        _RESOLVED_SEMANTICS = "arbitrary"
        if hasattr(_tensor_quant_impl, "clear_cache"):
            _tensor_quant_impl.clear_cache()
        return _tensor_quant_impl(x, scale=float(scale), offset=float(offset))


def _reference(x, scale=SCALE, offset=OFFSET):
    # Mirrors PPQ's QuantFunction exactly (true divide, round-half-even, clip, dequant).
    q = jnp.clip(jnp.round(x.astype(jnp.float32) / scale + offset), QUANT_MIN, QUANT_MAX)
    return ((q - offset) * scale).astype(x.dtype)


if __name__ == "__main__":
    key = jax.random.PRNGKey(0)

    # NCHW activation, size divisible by 128 -> zero-copy (no pad / no slice) path.
    x = jax.random.normal(key, (2, 4, 16, 16), dtype=jnp.float32)
    y = tensor_quant(x)
    jax.block_until_ready(y)
    y_ref = _reference(x)
    assert y.shape == x.shape and y.dtype == x.dtype
    assert jnp.allclose(y, y_ref, atol=1e-6), "mismatch vs reference fake-quant"

    # Ragged shape (exercises the tail-pad + slice path).
    x2 = jax.random.normal(jax.random.PRNGKey(1), (2, 3, 7, 5), dtype=jnp.float32)
    y2 = tensor_quant(x2)
    jax.block_until_ready(y2)
    assert y2.shape == x2.shape
    assert jnp.allclose(y2, _reference(x2), atol=1e-6), "mismatch (padded path)"

    # bf16 input (per-tile bytes held constant via dtype-scaled tile_r).
    x3 = jax.random.normal(jax.random.PRNGKey(2), (2, 8, 16, 16), dtype=jnp.bfloat16)
    y3 = tensor_quant(x3)
    jax.block_until_ready(y3)
    assert y3.dtype == x3.dtype
    assert jnp.allclose(y3.astype(jnp.float32), _reference(x3).astype(jnp.float32),
                        atol=1e-2), "mismatch (bf16 path)"

    # TODO(synk): observe()/render() (min-max observer statistics + config rendering)
    # and the delegator hook are calibration-time host logic, not part of the
    # forward hot path; omitted here.
    print("KERNEL_OK")
</pallas_src>

<mosaic_0001>
module attributes {stable_mosaic.version = 11 : i64} {
  func.func @_probe_kernel(%arg0: i32, %arg1: memref<8x128xf32, #tpu.memory_space<vmem>>, %arg2: memref<8x128xf32, #tpu.memory_space<vmem>>) attributes {dimension_semantics = [#tpu.dimension_semantics<core_parallel>], iteration_bounds = array<i64: 3>, scalar_prefetch = 0 : i64, scratch_operands = 0 : i64, tpu.core_type = #tpu.core_type<tc>, window_params = [{transform_indices = @transform_0, window_bounds = array<i64: 8, 128>}, {transform_indices = @transform_1, window_bounds = array<i64: 8, 128>}]} {
    %c0 = arith.constant 0 : index
    %c0_0 = arith.constant 0 : index
    %0 = vector.load %arg1[%c0, %c0_0] : memref<8x128xf32, #tpu.memory_space<vmem>>, vector<8x128xf32>
    %c0_1 = arith.constant 0 : index
    %c0_2 = arith.constant 0 : index
    %1 = vector.load %arg2[%c0_1, %c0_2] : memref<8x128xf32, #tpu.memory_space<vmem>>, vector<8x128xf32>
    tpu.vector_store %arg2[%c0_1, %c0_2], %0 {strides = array<i32>} : memref<8x128xf32, #tpu.memory_space<vmem>>, vector<8x128xf32>,
    return
  }
  func.func @transform_0(%arg0: i32) -> (i32, i32) {
    %c0_i32 = arith.constant 0 : i32
    %c0_i32_0 = arith.constant 0 : i32
    return %arg0, %c0_i32 : i32, i32
  }
  func.func @transform_1(%arg0: i32) -> (i32, i32) {
    %c0_i32 = arith.constant 0 : i32
    %c0_i32_0 = arith.constant 0 : i32
    return %arg0, %c0_i32 : i32, i32
  }
}

module attributes {stable_mosaic.version = 11 : i64} {
  func.func @_probe_kernel(%arg0: i32, %arg1: memref<8x128xf32, #tpu.memory_space<vmem>>, %arg2: memref<8x128xf32, #tpu.memory_space<vmem>>) attributes {dimension_semantics = [#tpu.dimension_semantics<parallel>], iteration_bounds = array<i64: 3>, scalar_prefetch = 0 : i64, scratch_operands = 0 : i64, tpu.core_type = #tpu.core_type<tc>, window_params = [{transform_indices = @transform_0, window_bounds = array<i64: 8, 128>}, {transform_indices = @transform_1, window_bounds = array<i64: 8, 128>}]} {
    %c0 = arith.constant 0 : index
    %c0_0 = arith.constant 0 : index
    %0 = vector.load %arg1[%c0, %c0_0] : memref<8x128xf32, #tpu.memory_space<vmem>>, vector<8x128xf32>
    %c0_1 = arith.constant 0 : index
    %c0_2 = arith.constant 0 : index
    %1 = vector.load %arg2[%c0_1, %c0_2] : memref<8x128xf32, #tpu.memory_space<vmem>>, vector<8x128xf32>
    tpu.vector_store %arg2[%c0_1, %c0_2], %0 {strides = array<i32>} : memref<8x128xf32, #tpu.memory_space<vmem>>, vector<8x128xf32>,
    return
  }
  func.func @transform_0(%arg0: i32) -> (i32, i32) {
    %c0_i32 = arith.constant 0 : i32
    %c0_i32_0 = arith.constant 0 : i32
    return %arg0, %c0_i32 : i32, i32
  }
  func.func @transform_1(%arg0: i32) -> (i32, i32) {
    %c0_i32 = arith.constant 0 : i32
    %c0_i32_0 = arith.constant 0 : i32
    return %arg0, %c0_i32 : i32, i32
  }
}

module attributes {stable_mosaic.version = 11 : i64} {
  func.func @kernel(%arg0: i32, %arg1: memref<16x128xf32, #tpu.memory_space<vmem>>, %arg2: memref<16x128xf32, #tpu.memory_space<vmem>>) attributes {dimension_semantics = [#tpu.dimension_semantics<arbitrary>], iteration_bounds = array<i64: 1>, scalar_prefetch = 0 : i64, scratch_operands = 0 : i64, tpu.core_type = #tpu.core_type<tc>, window_params = [{transform_indices = @transform_0, window_bounds = array<i64: 16, 128>}, {transform_indices = @transform_1, window_bounds = array<i64: 16, 128>}]} {
    %c0 = arith.constant 0 : index
    %c0_0 = arith.constant 0 : index
    %0 = vector.load %arg1[%c0, %c0_0] : memref<16x128xf32, #tpu.memory_space<vmem>>, vector<16x128xf32>
    %cst = arith.constant 5.000000e-02 : f32
    %1 = vector.broadcast %cst : f32 to vector<16x128xf32>
    %2 = arith.divf %0, %1 : vector<16x128xf32>
    %3 = math.roundeven %2 : vector<16x128xf32>
    %cst_1 = arith.constant -1.280000e+02 : f32
    %cst_2 = arith.constant 1.270000e+02 : f32
    %4 = vector.broadcast %cst_1 : f32 to vector<16x128xf32>
    %5 = arith.maximumf %4, %3 : vector<16x128xf32>
    %6 = vector.broadcast %cst_2 : f32 to vector<16x128xf32>
    %7 = arith.minimumf %6, %5 : vector<16x128xf32>
    %cst_3 = arith.constant 5.000000e-02 : f32
    %8 = vector.broadcast %cst_3 : f32 to vector<16x128xf32>
    %9 = arith.mulf %7, %8 : vector<16x128xf32>
    %c0_4 = arith.constant 0 : index
    %c0_5 = arith.constant 0 : index
    %10 = vector.load %arg2[%c0_4, %c0_5] : memref<16x128xf32, #tpu.memory_space<vmem>>, vector<16x128xf32>
    tpu.vector_store %arg2[%c0_4, %c0_5], %9 {strides = array<i32>} : memref<16x128xf32, #tpu.memory_space<vmem>>, vector<16x128xf32>,
    return
  }
  func.func @transform_0(%arg0: i32) -> (i32, i32) {
    %c0_i32 = arith.constant 0 : i32
    %c0_i32_0 = arith.constant 0 : i32
    return %arg0, %c0_i32 : i32, i32
  }
  func.func @transform_1(%arg0: i32) -> (i32, i32) {
    %c0_i32 = arith.constant 0 : i32
    %c0_i32_0 = arith.constant 0 : i32
    return %arg0, %c0_i32 : i32, i32
  }
}

</mosaic_0001>

<llo_original>
// kernel: tpu_custom_call.1
$region0: #{tpu_custom_call.1}
  #allocation0 [shape = 'u32[]', space=smem, size = 0x4, offset = 0x4, fixed_abs, tag = 'smem constant byte address 0x4 - core index']
  #allocation1 [shape = 'u32[144,128]{1,0:T(1,128)}', space=vmem, size = 0x12000, scoped, tag = 'internal scratch']
  %s0 = inlined_call_operand.hbm [shape: f32[24,128], index: 0, kind: input, shape index: {}]
  %s1 = inlined_call_operand.hbm [shape: f32[24,128], index: 1, kind: output, shape index: {}]
  %s2 = sld [smem:[#allocation0]]
  $region41: #{tpu_custom_call.1} parent=0
    _
  %s4 = ssub.s32 1, %s2
  %s5 = scalar_select 0, %s4, %s2
  $region1: #{tpu_custom_call.1} parent=0
    #allocation2 [shape = 'u8[8192]{0}', space=vmem, size = 0x2000, scoped, tag = 'input window, operand 0']
    #allocation3 [shape = 's32[2]{0}', space=sflag, size = 0x8, scoped, tag = 'scoped memory for tpu_custom_call.1']
    #allocation4 [shape = 's32[2]{0}', space=sflag, size = 0x8, scoped, tag = 'scoped memory for tpu_custom_call.1']
    #allocation5 [shape = 'u8[8192]{0}', space=vmem, size = 0x2000, scoped, tag = 'output window, operand 0']
    %6 = vsyncpa [#allocation3], 0
    %s7 = scalar_lea.sflag [#allocation3], 1
    %8 = vsyncpa %s7, 0
    %9 = vsyncpa [#allocation4], 0
    %s10 = scalar_lea.sflag [#allocation4], 1
    %11 = vsyncpa %s10, 0
    loop: start=0, step=1, limit=5
    $region2: #{tpu_custom_call.1} parent=1 // loop_pre_header
      _
    $region3: #{tpu_custom_call.1} parent=1 // loop_header
      %s13 = sphi 0, %s17
      %p14 = scmp.ge.s32.totalorder %s13, 5
      %s23 = sphi 0, %s25
      %s26 = sphi 0, %s23
      %s27 = sphi 0, %s26
      %s43 = sphi 0, %s27
      %s49 = sphi 0, %s51
      %s52 = sphi 0, %s49
      %s53 = sphi 0, %s52
      %s69 = sphi 0, %s53
    $region4: #{tpu_custom_call.1} parent=1 // loop_header_branch
      %16 = sbr.rel (%p14) target = $region8
    $region5: #{tpu_custom_call.1} parent=1 // loop_body
      %s18 = ssub.s32 %s13, 1
      %s19 = ssub.s32 %s13, 2
      %s20 = sadd.s32 %s13, 1
      %s21 = ssub.s32 %s13, %s20
      %p22 = scmp.eq.s32.totalorder %s21, 0
      %s24 = sadd.s32 %s23, 1
      %s25 = scalar_select %p22, %s23, %s24
      %p28 = pneg %p22
      %p29 = scmp.eq.s32.totalorder %s13, 2
      %p30 = por %p28, %p29
      %p31 = scmp.ne.s32.totalorder %s23, %s26
      %p32 = scmp.eq.s32.totalorder %s13, 0
      %p33 = por %p31, %p32
      %p34 = scmp.ne.s32.totalorder %s23, %s26
      %p35 = scmp.eq.s32.totalorder %s18, 2
      %p36 = por %p34, %p35
      %p37 = scmp.ne.s32.totalorder %s26, %s27
      %p38 = scmp.eq.s32.totalorder %s18, 0
      %p39 = por %p37, %p38
      %p40 = scmp.ne.s32.totalorder %s26, %s27
      %p41 = scmp.eq.s32.totalorder %s19, 2
      %p42 = por %p40, %p41
      %p44 = scmp.ne.s32.totalorder %s27, %s43
      %p45 = scmp.eq.s32.totalorder %s19, 0
      %p46 = por %p44, %p45
      %s47 = ssub.s32 %s13, %s20
      %p48 = scmp.eq.s32.totalorder %s47, 0
      %s50 = sadd.s32 %s49, 1
      %s51 = scalar_select %p48, %s49, %s50
      %p54 = pneg %p48
      %p55 = scmp.eq.s32.totalorder %s13, 2
      %p56 = por %p54, %p55
      %p57 = scmp.ne.s32.totalorder %s49, %s52
      %p58 = scmp.eq.s32.totalorder %s13, 0
      %p59 = por %p57, %p58
      %p60 = scmp.ne.s32.totalorder %s49, %s52
      %p61 = scmp.eq.s32.totalorder %s18, 2
      %p62 = por %p60, %p61
      %p63 = scmp.ne.s32.totalorder %s52, %s53
      %p64 = scmp.eq.s32.totalorder %s18, 0
      %p65 = por %p63, %p64
      %p66 = scmp.ne.s32.totalorder %s52, %s53
      %p67 = scmp.eq.s32.totalorder %s19, 2
      %p68 = por %p66, %p67
      %p70 = scmp.ne.s32.totalorder %s53, %s69
      %p71 = scmp.eq.s32.totalorder %s19, 0
      %p72 = por %p70, %p71
      %p73 = scmp.le.s32.totalorder 1, %s13
      %p74 = scmp.lt.s32.totalorder %s13, 4
      %p75 = pnand %p73, %p74
      %p76 = pneg %p75
      // Predicated region
      $region9: #{tpu_custom_call.1} parent=5 // pred_check
        _
      $region10: #{tpu_custom_call.1} parent=5 // pred_check_branch
        %78 = sbr.rel (%p75) target = $region12
      $region11: #{tpu_custom_call.1} parent=5 // pred_region
        %s79 = ssub.s32 %s13, 1
      $region12: #{tpu_custom_call.1} parent=5 // pred_fallthru
        _
      %p80 = scmp.lt.s32.totalorder %s13, 3
      // Predicated region
      $region13: #{tpu_custom_call.1} parent=5 // pred_check
        %p81 = pneg %p80
      $region14: #{tpu_custom_call.1} parent=5 // pred_check_branch
        %83 = sbr.rel (%p81) target = $region16
      $region15: #{tpu_custom_call.1} parent=5 // pred_region
        // Predicated region
        $region17: #{tpu_custom_call.1} parent=15 // pred_check
          %p84 = pneg %p33
        $region18: #{tpu_custom_call.1} parent=15 // pred_check_branch
          %86 = sbr.rel (%p84) target = $region20
        $region19: #{tpu_custom_call.1} parent=15 // pred_region
          %s87 = sand.u32 %s23, 1
          %s88 = scalar_lea.sflag [#allocation3], %s87
          %s89 = sand.u32 %s23, 1
          %s90 = smul.addr %s89, 8
          %s91 = scalar_lea.vmem [#allocation2], %s90
          %s93 = ssub.s32 128, 128
          %94 = vsyncadd %s88, %s93
          %s95 = smul.addr %s13, 128
          %s96 = scalar_lea.hbm %s0, %s95
          %s98 = sshll.u32 %s91, 4
          %s99 = int_to_ptr.vmem [resolvable:$true] %s98
          %101 = dma.hbm_to_vmem [thread:$0]  %s96, 128, %s99, %s88
        $region20: #{tpu_custom_call.1} parent=15 // pred_fallthru
          _
      $region16: #{tpu_custom_call.1} parent=5 // pred_fallthru
        _
      %p102 = scmp.le.s32.totalorder 1, %s13
      %p103 = scmp.lt.s32.totalorder %s13, 4
      %p104 = pnand %p102, %p103
      %p105 = pneg %p104
      // Predicated region
      $region21: #{tpu_custom_call.1} parent=5 // pred_check
        _
      $region22: #{tpu_custom_call.1} parent=5 // pred_check_branch
        %107 = sbr.rel (%p104) target = $region24
      $region23: #{tpu_custom_call.1} parent=5 // pred_region
        %s108 = ssub.s32 %s13, 1
        %s109 = sand.u32 %s26, 1
        %s110 = scalar_lea.sflag [#allocation3], %s109
        %s111 = sand.u32 %s26, 1
        %s112 = smul.addr %s111, 8
        %s113 = scalar_lea.vmem [#allocation2], %s112
        // Predicated region
        $region25: #{tpu_custom_call.1} parent=23 // pred_check
          %p114 = pneg %p39
        $region26: #{tpu_custom_call.1} parent=23 // pred_check_branch
          %116 = sbr.rel (%p114) target = $region28
        $region27: #{tpu_custom_call.1} parent=23 // pred_region
          %117 = dma.done %s110, 128
        $region28: #{tpu_custom_call.1} parent=23 // pred_fallthru
          _
        %s118 = sand.u32 %s26, 1
        %s119 = scalar_lea.sflag [#allocation3], %s118
        %s120 = sand.u32 %s26, 1
        %s121 = smul.addr %s120, 8
        %s122 = scalar_lea.vmem [#allocation2], %s121
        %p123 = pneg %p39
        %p124 = pneg %p36
        %p125 = pneg %p65
        %p126 = pneg %p62
        %s127 = sand.u32 %s52, 1
        %s128 = scalar_lea.sflag [#allocation4], %s127
        %s129 = sand.u32 %s52, 1
        %s130 = smul.addr %s129, 8
        %s131 = scalar_lea.vmem [#allocation5], %s130
        %v132 = vld [vmem:[%s113] sm:$0xff]
        %133 = vst [vmem:[%s131] sm:$0xff] %v132
        %s134 = sand.u32 %s52, 1
        %s135 = scalar_lea.sflag [#allocation4], %s134
        %s136 = sand.u32 %s52, 1
        %s137 = smul.addr %s136, 8
        %s138 = scalar_lea.vmem [#allocation5], %s137
        // Predicated region
        $region29: #{tpu_custom_call.1} parent=23 // pred_check
          %p139 = pneg %p62
        $region30: #{tpu_custom_call.1} parent=23 // pred_check_branch
          %141 = sbr.rel (%p139) target = $region32
        $region31: #{tpu_custom_call.1} parent=23 // pred_region
          %s143 = ssub.s32 128, 128
          %144 = vsyncadd %s135, %s143
          %s145 = smul.addr %s18, 128
          %s146 = scalar_lea.hbm %s1, %s145
          %s148 = sshll.u32 %s138, 4
          %s149 = int_to_ptr.vmem [resolvable:$true] %s148
          %151 = dma.vmem_to_hbm [thread:$0]  %s149, 128, %s146, %s135
        $region32: #{tpu_custom_call.1} parent=23 // pred_fallthru
          _
      $region24: #{tpu_custom_call.1} parent=5 // pred_fallthru
        _
      %p152 = scmp.le.s32.totalorder 2, %s13
      // Predicated region
      $region33: #{tpu_custom_call.1} parent=5 // pred_check
        %p153 = pneg %p152
      $region34: #{tpu_custom_call.1} parent=5 // pred_check_branch
        %155 = sbr.rel (%p153) target = $region36
      $region35: #{tpu_custom_call.1} parent=5 // pred_region
        %s156 = ssub.s32 %s13, 2
        // Predicated region
        $region37: #{tpu_custom_call.1} parent=35 // pred_check
          %p157 = pneg %p68
        $region38: #{tpu_custom_call.1} parent=35 // pred_check_branch
          %159 = sbr.rel (%p157) target = $region40
        $region39: #{tpu_custom_call.1} parent=35 // pred_region
          %s160 = sand.u32 %s53, 1
          %s161 = scalar_lea.sflag [#allocation4], %s160
          %s162 = sand.u32 %s53, 1
          %s163 = smul.addr %s162, 8
          %s164 = scalar_lea.vmem [#allocation5], %s163
          %165 = dma.done %s161, 128
        $region40: #{tpu_custom_call.1} parent=35 // pred_fallthru
          _
      $region36: #{tpu_custom_call.1} parent=5 // pred_fallthru
        _
    $region6: #{tpu_custom_call.1} parent=1 // loop_footer
      %s17 = sadd.s32 1, %s13
    $region7: #{tpu_custom_call.1} parent=1 // loop_footer_branch
      %12 = sbr.rel target = $region3
    $region8: #{tpu_custom_call.1} parent=1 // loop_exit
      _
    %166 = vsyncpa [#allocation3], 1
    %s167 = scalar_lea.sflag [#allocation3], 1
    %168 = vsyncpa %s167, 1
    %169 = vsyncpa [#allocation4], 1
    %s170 = scalar_lea.sflag [#allocation4], 1
    %171 = vsyncpa %s170, 1

// kernel: _tensor_quant_impl.1
$region0: #{_tensor_quant_impl.1}
  #allocation0 [shape = 'u32[]', space=smem, size = 0x4, offset = 0x4, fixed_abs, tag = 'smem constant byte address 0x4 - core index']
  #allocation1 [shape = 'u32[144,128]{1,0:T(1,128)}', space=vmem, size = 0x12000, scoped, tag = 'internal scratch']
  %s0 = inlined_call_operand.vmem [shape: f32[16,128], index: 0, kind: input, shape index: {}]
  %s1 = inlined_call_operand.vmem [shape: f32[16,128], index: 1, kind: output, shape index: {}]
  %s2 = sld [smem:[#allocation0]]
  $region14: #{_tensor_quant_impl.1} parent=0
    _
  %s4 = ssub.s32 1, %s2
  %s5 = scalar_select 0, %s4, %s2
  // Predicated region
  $region2: #{_tensor_quant_impl.1} parent=0 // pred_check
    _
  $region3: #{_tensor_quant_impl.1} parent=0 // pred_check_branch
    %7 = sbr.rel (0) target = $region5
  $region4: #{_tensor_quant_impl.1} parent=0 // pred_region
    _
  $region5: #{_tensor_quant_impl.1} parent=0 // pred_fallthru
    _
  %v8 = vld [vmem:[%s0] sm:$0xff]
  %v9 = vld [vmem:[%s0 + $0x8] sm:$0xff]
  %v10 = vrcp.pop 0.05
  %v11 = vmul.f32 %v8, %v10
  %v12 = vmul.f32 %v9, %v10
  %v13 = vround.ne.pseudo %v11
  %v14 = vround.ne.pseudo %v12
  %v15 = vmax.f32 %v13, -128.0
  %v16 = vmax.f32 %v14, -128.0
  %v17 = vmin.f32 %v15, 127.0
  %v18 = vmin.f32 %v16, 127.0
  %v19 = vmul.f32 %v17, 0.05
  %v20 = vmul.f32 %v18, 0.05
  %21 = vst [vmem:[%s1] sm:$0xff] %v19
  %22 = vst [vmem:[%s1 + $0x8] sm:$0xff] %v20
  // Predicated region
  $region6: #{_tensor_quant_impl.1} parent=0 // pred_check
    _
  $region7: #{_tensor_quant_impl.1} parent=0 // pred_check_branch
    %24 = sbr.rel (0) target = $region9
  $region8: #{_tensor_quant_impl.1} parent=0 // pred_region
    _
  $region9: #{_tensor_quant_impl.1} parent=0 // pred_fallthru
    _
  // Predicated region
  $region10: #{_tensor_quant_impl.1} parent=0 // pred_check
    _
  $region11: #{_tensor_quant_impl.1} parent=0 // pred_check_branch
    %26 = sbr.rel (0) target = $region13
  $region12: #{_tensor_quant_impl.1} parent=0 // pred_region
    _
  $region13: #{_tensor_quant_impl.1} parent=0 // pred_fallthru
    _

</llo_original>
